<compile_context>
chip_gen: v5e
topology: v5e:2x2
jax: 0.10.0
libtpu: 0.0.40
codegen_flags: <defaults>
</compile_context>

<pallas_src>
import math

import jax
import jax.numpy as jnp
from jax import lax
from jax.experimental import pallas as pl
from jax.experimental.pallas import tpu as pltpu


# Word tables up to this size are kept VMEM-resident and gathered with the fused two-hot MXU
# matmul; larger tables stay in HBM and use the DMA row-gather path.
_ONEHOT_TABLE_BYTES_MAX = 4 * 1024 * 1024
_COMB_ROWS = 128                      # (task, segment) combined table padded to a clean MXU K
_VMEM_LIMIT = 32 * 1024 * 1024


# --------------------------------------------------------------------------------------------
# Kernels
# --------------------------------------------------------------------------------------------
def _embed_onehot_kernel(wid_ref, cid_ref, fused_tab_ref, out_ref):
    """One (block_rows, D) tile: fused two-hot gather on the MXU (small, VMEM-resident table)."""
    tb = out_ref.shape[0]
    k = fused_tab_ref.shape[0]
    iota = lax.broadcasted_iota(jnp.int32, (tb, k), 1)
    # wid hits rows [0, V); cid is pre-offset by +V in the wrapper, so the two hot columns never
    # collide: two_hot @ fused_table == word + (task+seg)/sqrt(D) in a single MXU pass.
    two_hot = ((iota == wid_ref[...]) | (iota == cid_ref[...])).astype(jnp.float32)
    out_ref[...] = jnp.dot(
        two_hot, fused_tab_ref[...],
        precision=lax.Precision.HIGHEST,            # keep table rows exact (review note)
        preferred_element_type=jnp.float32,
    ).astype(out_ref.dtype)


def _embed_dma_kernel(wid_smem, cid_ref, word_hbm, comb_tab_ref, out_ref, rows_vmem, copy_sem):
    """One (block_rows, D) tile: per-row DMA gather from the HBM-resident word table."""
    tb = out_ref.shape[0]
    base = pl.program_id(0) * tb

    # 1) Kick off one row DMA per token of this tile (the word table never enters VMEM whole).
    def _start(r, carry):
        pltpu.make_async_copy(
            word_hbm.at[wid_smem[base + r]], rows_vmem.at[r], copy_sem.at[0]
        ).start()
        return carry
    lax.fori_loop(0, tb, _start, 0)

    # 2) Overlap: (task+seg)/sqrt(D) via a small one-hot matmul while the row gather is in flight.
    c = comb_tab_ref.shape[0]
    oh = (lax.broadcasted_iota(jnp.int32, (tb, c), 1) == cid_ref[...]).astype(jnp.float32)
    comb = jnp.dot(oh, comb_tab_ref[...],
                   precision=lax.Precision.HIGHEST,
                   preferred_element_type=jnp.float32)

    # 3) Wait for the tb equally-sized row copies, then one fused add + full-tile store.
    def _wait(r, carry):
        pltpu.make_async_copy(
            word_hbm.at[wid_smem[base + r]], rows_vmem.at[r], copy_sem.at[0]
        ).wait()
        return carry
    lax.fori_loop(0, tb, _wait, 0)

    out_ref[...] = rows_vmem[...].astype(jnp.float32) + comb


# --------------------------------------------------------------------------------------------
# Wrapper
# --------------------------------------------------------------------------------------------
def _choose_tiling(n_tokens, max_block_rows):
    """Pick (block_rows, padded_token_count).

    Prefers a block_rows that divides the token count exactly (no ragged tile and no
    pad-then-slice copy on the output) and a grid of >= 2 tiles (so ("parallel",) can shard
    across v7x's two TensorCores); falls back to minimal padding when the token count has no
    usable multiple-of-8 divisor (e.g. 8 * prime)."""
    target = min(max_block_rows, n_tokens // 2 if n_tokens >= 16 else n_tokens)
    target = max(8, target - target % 8)
    if n_tokens % 8 == 0:
        best = 0
        for br in range(8, target + 1, 8):
            if n_tokens % br == 0:
                best = br
        if best >= max(8, target // 4):       # good-enough exact divisor: no padding at all
            return best, n_tokens
    n_pad = ((n_tokens + target - 1) // target) * target
    return target, n_pad


def _combined_table(task_table, segment_table, d, inv_scale):
    """(task + segment) folded into one pre-scaled table, padded to _COMB_ROWS rows."""
    comb = (task_table[:, None, :] + segment_table[None, :, :]).reshape(9, d)
    comb = comb.astype(jnp.float32) * jnp.float32(inv_scale)
    return jnp.pad(comb, ((0, _COMB_ROWS - 9), (0, 0)))


def embedding_layer_forward(word_input, position_input, task_input, segment_input,
                            word_table, task_table, segment_table,
                            *, max_block_rows=1024, gather_mode=None):
    """Pallas implementation of EmbeddingLayer.forward (position_input is unused there)."""
    del position_input                      # unused in the reference forward pass
    B, S = word_input.shape
    V, D = word_table.shape
    N = B * S
    inv_scale = 1.0 / math.sqrt(float(D))

    if gather_mode is None:
        table_bytes = V * D * word_table.dtype.itemsize
        gather_mode = "onehot" if table_bytes <= _ONEHOT_TABLE_BYTES_MAX else "dma"

    wid = word_input.reshape(N).astype(jnp.int32)
    cid = (task_input.reshape(N).astype(jnp.int32) * 3
           + segment_input.reshape(N).astype(jnp.int32))

    block_rows, N_pad = _choose_tiling(N, max_block_rows)
    pad = N_pad - N
    if pad:                                 # only for ragged B*S; pad rows use id 0, sliced off
        wid = jnp.pad(wid, (0, pad))
        cid = jnp.pad(cid, (0, pad))
    n_tiles = N_pad // block_rows

    comb_tab = _combined_table(task_table, segment_table, D, inv_scale)
    cparams = pltpu.CompilerParams(
        dimension_semantics=("parallel",),  # independent tiles -> both TensorCores on v7x
        vmem_limit_bytes=_VMEM_LIMIT,
    )
    single_buffer = pl.Buffered(1)          # constant-index tables: DMA'd once, 1 buffer only

    if gather_mode == "onehot":
        # Fuse the word and combined tables so the kernel needs a single MXU pass per tile.
        fused_tab = jnp.concatenate([word_table.astype(jnp.float32), comb_tab], axis=0)
        K = V + _COMB_ROWS
        out_flat = pl.pallas_call(
            _embed_onehot_kernel,
            out_shape=jax.ShapeDtypeStruct((N_pad, D), jnp.float32),
            grid_spec=pltpu.PrefetchScalarGridSpec(
                num_scalar_prefetch=0,
                grid=(n_tiles,),
                in_specs=[
                    pl.BlockSpec((block_rows, 1), lambda i: (i, 0)),    # word ids
                    pl.BlockSpec((block_rows, 1), lambda i: (i, 0)),    # V-offset combined ids
                    pl.BlockSpec((K, D), lambda i: (0, 0),
                                 pipeline_mode=single_buffer),          # fused table (VMEM)
                ],
                out_specs=pl.BlockSpec((block_rows, D), lambda i: (i, 0)),
            ),
            compiler_params=cparams,
        )(wid.reshape(N_pad, 1), (cid + V).reshape(N_pad, 1), fused_tab)

    elif gather_mode == "dma":
        # Production path: word table stays in HBM; flattened word ids are scalar-prefetched
        # into SMEM and drive one row DMA per token.
        out_flat = pl.pallas_call(
            _embed_dma_kernel,
            out_shape=jax.ShapeDtypeStruct((N_pad, D), jnp.float32),
            grid_spec=pltpu.PrefetchScalarGridSpec(
                num_scalar_prefetch=1,                                   # wid -> SMEM
                grid=(n_tiles,),
                in_specs=[
                    pl.BlockSpec((block_rows, 1), lambda i, wid_s: (i, 0)),   # combined ids
                    pl.BlockSpec(memory_space=pl.ANY),                        # word table in HBM
                    pl.BlockSpec((_COMB_ROWS, D), lambda i, wid_s: (0, 0),
                                 pipeline_mode=single_buffer),                # comb table (VMEM)
                ],
                out_specs=pl.BlockSpec((block_rows, D), lambda i, wid_s: (i, 0)),
                scratch_shapes=[
                    pltpu.VMEM((block_rows, D), word_table.dtype),   # gathered word rows
                    pltpu.SemaphoreType.DMA((1,)),
                ],
            ),
            compiler_params=cparams,
        )(wid, cid.reshape(N_pad, 1), word_table, comb_tab)
    else:
        raise ValueError(f"unknown gather_mode: {gather_mode!r}")

    out_flat = out_flat if pad == 0 else out_flat[:N]    # slice (extra copy) only for ragged B*S
    return out_flat.reshape(B, S, D)


# --------------------------------------------------------------------------------------------
# Reference + demo
# --------------------------------------------------------------------------------------------
def _reference(word_input, task_input, segment_input, word_table, task_table, segment_table):
    D = word_table.shape[1]
    return (word_table[word_input]
            + (task_table[task_input] + segment_table[segment_input]) / math.sqrt(float(D)))


if __name__ == "__main__":
    # Small synthetic shapes consistent with the module's forward:
    #   batch B=2, seq S=8, embedding_dim D=128, synthetic vocab V=128.
    # TODO(synk): the pretrained facebook/bart-base `shared` weights are replaced by a synthetic
    #             table here (no network / file access); the "dma" path below is the layout used
    #             for the real 50K x 768 table.
    B, S, D, V = 2, 8, 128, 128

    key = jax.random.PRNGKey(0)
    k_w, k_t, k_s, k_wid, k_tid, k_sid = jax.random.split(key, 6)

    word_table = jax.random.normal(k_w, (V, D), dtype=jnp.float32) * 0.02
    task_table = jax.random.normal(k_t, (3, D), dtype=jnp.float32) * 0.02
    segment_table = jax.random.normal(k_s, (3, D), dtype=jnp.float32) * 0.02

    word_input = jax.random.randint(k_wid, (B, S), 0, V, dtype=jnp.int32)
    position_input = jnp.tile(jnp.arange(S, dtype=jnp.int32)[None, :], (B, 1))  # unused by forward
    task_input = jax.random.randint(k_tid, (B, S), 0, 3, dtype=jnp.int32)
    segment_input = jax.random.randint(k_sid, (B, S), 0, 3, dtype=jnp.int32)

    ref = _reference(word_input, task_input, segment_input,
                     word_table, task_table, segment_table)

    # Small-vocab fused two-hot MXU path (auto-selected for these shapes).
    out_onehot = embedding_layer_forward(word_input, position_input, task_input, segment_input,
                                         word_table, task_table, segment_table,
                                         gather_mode="onehot")
    # Production HBM-resident DMA row-gather path, exercised at small shapes for coverage.
    out_dma = embedding_layer_forward(word_input, position_input, task_input, segment_input,
                                      word_table, task_table, segment_table,
                                      gather_mode="dma")
    out_onehot, out_dma = jax.block_until_ready((out_onehot, out_dma))

    assert out_onehot.shape == (B, S, D), out_onehot.shape
    assert out_dma.shape == (B, S, D), out_dma.shape
    assert jnp.allclose(out_onehot, ref, atol=1e-5, rtol=1e-5), \
        float(jnp.max(jnp.abs(out_onehot - ref)))
    assert jnp.allclose(out_dma, ref, atol=1e-5, rtol=1e-5), \
        float(jnp.max(jnp.abs(out_dma - ref)))
    print("KERNEL_OK")
</pallas_src>

<mosaic_0001>
module attributes {stable_mosaic.version = 11 : i64} {
  func.func @_embed_onehot_kernel(%arg0: i32, %arg1: memref<8x1xi32, #tpu.memory_space<vmem>>, %arg2: memref<8x1xi32, #tpu.memory_space<vmem>>, %arg3: memref<256x128xf32, #tpu.memory_space<vmem>>, %arg4: memref<8x128xf32, #tpu.memory_space<vmem>>) attributes {dimension_semantics = [#tpu.dimension_semantics<parallel>], iteration_bounds = array<i64: 2>, scalar_prefetch = 0 : i64, scratch_operands = 0 : i64, tpu.core_type = #tpu.core_type<tc>, window_params = [{transform_indices = @transform_0, window_bounds = array<i64: 8, 1>}, {transform_indices = @transform_1, window_bounds = array<i64: 8, 1>}, {pipeline_mode = #tpu.pipeline_mode<synchronous>, transform_indices = @transform_2, window_bounds = array<i64: 256, 128>}, {transform_indices = @transform_3, window_bounds = array<i64: 8, 128>}]} {
    %0 = tpu.iota {dimensions = array<i32: 1>} : vector<8x256xi32>
    %c0 = arith.constant 0 : index
    %c0_0 = arith.constant 0 : index
    %1 = vector.load %arg1[%c0, %c0_0] : memref<8x1xi32, #tpu.memory_space<vmem>>, vector<8x1xi32>
    %2 = vector.broadcast %1 : vector<8x1xi32> to vector<8x256xi32>
    %3 = arith.cmpi eq, %0, %2 : vector<8x256xi32>
    %c0_1 = arith.constant 0 : index
    %c0_2 = arith.constant 0 : index
    %4 = vector.load %arg2[%c0_1, %c0_2] : memref<8x1xi32, #tpu.memory_space<vmem>>, vector<8x1xi32>
    %5 = vector.broadcast %4 : vector<8x1xi32> to vector<8x256xi32>
    %6 = arith.cmpi eq, %0, %5 : vector<8x256xi32>
    %7 = arith.ori %3, %6 : vector<8x256xi1>
    %8 = arith.extui %7 : vector<8x256xi1> to vector<8x256xi32>
    %9 = arith.sitofp %8 : vector<8x256xi32> to vector<8x256xf32>
    %c0_3 = arith.constant 0 : index
    %c0_4 = arith.constant 0 : index
    %10 = vector.load %arg3[%c0_3, %c0_4] : memref<256x128xf32, #tpu.memory_space<vmem>>, vector<256x128xf32>
    %cst = arith.constant dense<0.000000e+00> : vector<8x128xf32>
    %11 = tpu.matmul %9, %10, %cst {dimension_numbers = #tpu.dot_dimension_numbers<[1], [0], [0], [1], [0, 0, 1, 1], [], []>, precision = #tpu.contract_precision<fp32>} : vector<8x256xf32>, vector<256x128xf32>, vector<8x128xf32> -> vector<8x128xf32>
    %c0_5 = arith.constant 0 : index
    %c0_6 = arith.constant 0 : index
    %12 = vector.load %arg4[%c0_5, %c0_6] : memref<8x128xf32, #tpu.memory_space<vmem>>, vector<8x128xf32>
    tpu.vector_store %arg4[%c0_5, %c0_6], %11 {strides = array<i32>} : memref<8x128xf32, #tpu.memory_space<vmem>>, vector<8x128xf32>,
    return
  }
  func.func @transform_0(%arg0: i32) -> (i32, i32) {
    %c0_i32 = arith.constant 0 : i32
    %c0_i32_0 = arith.constant 0 : i32
    return %arg0, %c0_i32 : i32, i32
  }
  func.func @transform_1(%arg0: i32) -> (i32, i32) {
    %c0_i32 = arith.constant 0 : i32
    %c0_i32_0 = arith.constant 0 : i32
    return %arg0, %c0_i32 : i32, i32
  }
  func.func @transform_2(%arg0: i32) -> (i32, i32) {
    %c0_i32 = arith.constant 0 : i32
    %c0_i32_0 = arith.constant 0 : i32
    %c0_i32_1 = arith.constant 0 : i32
    return %c0_i32, %c0_i32_0 : i32, i32
  }
  func.func @transform_3(%arg0: i32) -> (i32, i32) {
    %c0_i32 = arith.constant 0 : i32
    %c0_i32_0 = arith.constant 0 : i32
    return %arg0, %c0_i32 : i32, i32
  }
}

</mosaic_0001>

<llo_original>
// kernel: tpu_custom_call.1
$region0: #{tpu_custom_call.1}
  #allocation0 [shape = 'u32[]', space=smem, size = 0x4, offset = 0x4, fixed_abs, tag = 'smem constant byte address 0x4 - core index']
  #allocation1 [shape = 'u32[72,128]{1,0:T(1,128)}', space=vmem, size = 0x9000, scoped, tag = 'internal scratch']
  %s0 = inlined_call_operand.vmem [shape: s32[16,1], index: 0, kind: input, shape index: {}]
  %s1 = inlined_call_operand.vmem [shape: s32[16,1], index: 1, kind: input, shape index: {}]
  %s2 = inlined_call_operand.hbm [shape: f32[256,128], index: 2, kind: input, shape index: {}]
  %s3 = inlined_call_operand.hbm [shape: f32[16,128], index: 3, kind: output, shape index: {}]
  %s4 = sld [smem:[#allocation0]]
  $region49: #{tpu_custom_call.1} parent=0
    _
  %s6 = ssub.s32 1, %s4
  %s7 = scalar_select 0, %s6, %s4
  $region1: #{tpu_custom_call.1} parent=0
    #allocation2 [shape = 'u8[131072]{0}', space=vmem, size = 0x20000, scoped, tag = 'input window, operand 2, single buffered']
    #allocation3 [shape = 's32[2]{0}', space=sflag, size = 0x8, scoped, tag = 'scoped memory for tpu_custom_call.1']
    #allocation4 [shape = 's32[2]{0}', space=sflag, size = 0x8, scoped, tag = 'scoped memory for tpu_custom_call.1']
    #allocation5 [shape = 'u8[8192]{0}', space=vmem, size = 0x2000, scoped, tag = 'output window, operand 0']
    %8 = vsyncpa [#allocation3], 0
    %9 = vsyncpa [#allocation4], 0
    %s10 = scalar_lea.sflag [#allocation4], 1
    %11 = vsyncpa %s10, 0
    loop: start=0, step=1, limit=4
    $region2: #{tpu_custom_call.1} parent=1 // loop_pre_header
      _
    $region3: #{tpu_custom_call.1} parent=1 // loop_header
      %s13 = sphi 0, %s17
      %p14 = scmp.ge.s32.totalorder %s13, 4
      %s23 = sphi 0, %s25
      %s26 = sphi 0, %s23
      %s27 = sphi 0, %s26
      %s43 = sphi 0, %s27
      %s49 = sphi 0, %s51
      %s52 = sphi 0, %s49
      %s53 = sphi 0, %s52
      %s69 = sphi 0, %s53
      %s73 = sphi 0, %s73
      %s75 = sphi 0, %s73
      %s76 = sphi 0, %s75
      %s90 = sphi 0, %s76
      %s96 = sphi 0, %s98
      %s99 = sphi 0, %s96
      %s100 = sphi 0, %s99
      %s116 = sphi 0, %s100
    $region4: #{tpu_custom_call.1} parent=1 // loop_header_branch
      %16 = sbr.rel (%p14) target = $region8
    $region5: #{tpu_custom_call.1} parent=1 // loop_body
      %s18 = ssub.s32 %s13, 1
      %s19 = ssub.s32 %s13, 2
      %s20 = sadd.s32 %s13, 1
      %s21 = ssub.s32 %s13, %s20
      %p22 = scmp.eq.s32.totalorder %s21, 0
      %s24 = sadd.s32 %s23, 1
      %s25 = scalar_select %p22, %s23, %s24
      %p28 = pneg %p22
      %p29 = scmp.eq.s32.totalorder %s13, 1
      %p30 = por %p28, %p29
      %p31 = scmp.ne.s32.totalorder %s23, %s26
      %p32 = scmp.eq.s32.totalorder %s13, 0
      %p33 = por %p31, %p32
      %p34 = scmp.ne.s32.totalorder %s23, %s26
      %p35 = scmp.eq.s32.totalorder %s18, 1
      %p36 = por %p34, %p35
      %p37 = scmp.ne.s32.totalorder %s26, %s27
      %p38 = scmp.eq.s32.totalorder %s18, 0
      %p39 = por %p37, %p38
      %p40 = scmp.ne.s32.totalorder %s26, %s27
      %p41 = scmp.eq.s32.totalorder %s19, 1
      %p42 = por %p40, %p41
      %p44 = scmp.ne.s32.totalorder %s27, %s43
      %p45 = scmp.eq.s32.totalorder %s19, 0
      %p46 = por %p44, %p45
      %s47 = ssub.s32 %s13, %s20
      %p48 = scmp.eq.s32.totalorder %s47, 0
      %s50 = sadd.s32 %s49, 1
      %s51 = scalar_select %p48, %s49, %s50
      %p54 = pneg %p48
      %p55 = scmp.eq.s32.totalorder %s13, 1
      %p56 = por %p54, %p55
      %p57 = scmp.ne.s32.totalorder %s49, %s52
      %p58 = scmp.eq.s32.totalorder %s13, 0
      %p59 = por %p57, %p58
      %p60 = scmp.ne.s32.totalorder %s49, %s52
      %p61 = scmp.eq.s32.totalorder %s18, 1
      %p62 = por %p60, %p61
      %p63 = scmp.ne.s32.totalorder %s52, %s53
      %p64 = scmp.eq.s32.totalorder %s18, 0
      %p65 = por %p63, %p64
      %p66 = scmp.ne.s32.totalorder %s52, %s53
      %p67 = scmp.eq.s32.totalorder %s19, 1
      %p68 = por %p66, %p67
      %p70 = scmp.ne.s32.totalorder %s53, %s69
      %p71 = scmp.eq.s32.totalorder %s19, 0
      %p72 = por %p70, %p71
      %s74 = sadd.s32 %s73, 1
      %p77 = scmp.eq.s32.totalorder %s13, 1
      %p78 = scmp.ne.s32.totalorder %s73, %s75
      %p79 = scmp.eq.s32.totalorder %s13, 0
      %p80 = por %p78, %p79
      %p81 = scmp.ne.s32.totalorder %s73, %s75
      %p82 = scmp.eq.s32.totalorder %s18, 1
      %p83 = por %p81, %p82
      %p84 = scmp.ne.s32.totalorder %s75, %s76
      %p85 = scmp.eq.s32.totalorder %s18, 0
      %p86 = por %p84, %p85
      %p87 = scmp.ne.s32.totalorder %s75, %s76
      %p88 = scmp.eq.s32.totalorder %s19, 1
      %p89 = por %p87, %p88
      %p91 = scmp.ne.s32.totalorder %s76, %s90
      %p92 = scmp.eq.s32.totalorder %s19, 0
      %p93 = por %p91, %p92
      %s94 = ssub.s32 %s13, %s20
      %p95 = scmp.eq.s32.totalorder %s94, 0
      %s97 = sadd.s32 %s96, 1
      %s98 = scalar_select %p95, %s96, %s97
      %p101 = pneg %p95
      %p102 = scmp.eq.s32.totalorder %s13, 1
      %p103 = por %p101, %p102
      %p104 = scmp.ne.s32.totalorder %s96, %s99
      %p105 = scmp.eq.s32.totalorder %s13, 0
      %p106 = por %p104, %p105
      %p107 = scmp.ne.s32.totalorder %s96, %s99
      %p108 = scmp.eq.s32.totalorder %s18, 1
      %p109 = por %p107, %p108
      %p110 = scmp.ne.s32.totalorder %s99, %s100
      %p111 = scmp.eq.s32.totalorder %s18, 0
      %p112 = por %p110, %p111
      %p113 = scmp.ne.s32.totalorder %s99, %s100
      %p114 = scmp.eq.s32.totalorder %s19, 1
      %p115 = por %p113, %p114
      %p117 = scmp.ne.s32.totalorder %s100, %s116
      %p118 = scmp.eq.s32.totalorder %s19, 0
      %p119 = por %p117, %p118
      %p120 = scmp.le.s32.totalorder 1, %s13
      %p121 = scmp.lt.s32.totalorder %s13, 3
      %p122 = pnand %p120, %p121
      %p123 = pneg %p122
      // Predicated region
      $region9: #{tpu_custom_call.1} parent=5 // pred_check
        _
      $region10: #{tpu_custom_call.1} parent=5 // pred_check_branch
        %125 = sbr.rel (%p122) target = $region12
      $region11: #{tpu_custom_call.1} parent=5 // pred_region
        %s126 = ssub.s32 %s13, 1
        // Predicated region
        $region13: #{tpu_custom_call.1} parent=11 // pred_check
          %p127 = pneg %p86
        $region14: #{tpu_custom_call.1} parent=11 // pred_check_branch
          %129 = sbr.rel (%p127) target = $region16
        $region15: #{tpu_custom_call.1} parent=11 // pred_region
          %131 = vsyncadd [#allocation3], 0
          %s132 = sshll.u32 %s2, 4
          %s133 = int_to_ptr.hbm [resolvable:$true] %s132
          %s134 = sshll.u32 [#allocation2], 4
          %s135 = int_to_ptr.vmem [resolvable:$true] %s134
          %140 = dma.hbm_to_vmem [thread:$0]  %s133, 4096, %s135, [#allocation3], 128, 128, 8
        $region16: #{tpu_custom_call.1} parent=11 // pred_fallthru
          _
      $region12: #{tpu_custom_call.1} parent=5 // pred_fallthru
        _
      %p141 = scmp.lt.s32.totalorder %s13, 2
      // Predicated region
      $region17: #{tpu_custom_call.1} parent=5 // pred_check
        %p142 = pneg %p141
      $region18: #{tpu_custom_call.1} parent=5 // pred_check_branch
        %144 = sbr.rel (%p142) target = $region20
      $region19: #{tpu_custom_call.1} parent=5 // pred_region
        // Predicated region
        $region21: #{tpu_custom_call.1} parent=19 // pred_check
          %p145 = pneg %p33
        $region22: #{tpu_custom_call.1} parent=19 // pred_check_branch
          %147 = sbr.rel (%p145) target = $region24
        $region23: #{tpu_custom_call.1} parent=19 // pred_region
          %p148 = scmp.lt.s32.totalorder %s13, 1
          %s149 = scalar_select %p148, %s13, 1
          %s150 = smul.addr %s149, 8
          %s151 = scalar_lea.vmem %s0, %s150
        $region24: #{tpu_custom_call.1} parent=19 // pred_fallthru
          _
        // Predicated region
        $region25: #{tpu_custom_call.1} parent=19 // pred_check
          %p152 = pneg %p59
        $region26: #{tpu_custom_call.1} parent=19 // pred_check_branch
          %154 = sbr.rel (%p152) target = $region28
        $region27: #{tpu_custom_call.1} parent=19 // pred_region
          %p155 = scmp.lt.s32.totalorder %s13, 1
          %s156 = scalar_select %p155, %s13, 1
          %s157 = smul.addr %s156, 8
          %s158 = scalar_lea.vmem %s1, %s157
        $region28: #{tpu_custom_call.1} parent=19 // pred_fallthru
          _
      $region20: #{tpu_custom_call.1} parent=5 // pred_fallthru
        _
      %p159 = scmp.le.s32.totalorder 1, %s13
      %p160 = scmp.lt.s32.totalorder %s13, 3
      %p161 = pnand %p159, %p160
      %p162 = pneg %p161
      // Predicated region
      $region29: #{tpu_custom_call.1} parent=5 // pred_check
        _
      $region30: #{tpu_custom_call.1} parent=5 // pred_check_branch
        %164 = sbr.rel (%p161) target = $region32
      $region31: #{tpu_custom_call.1} parent=5 // pred_region
        %s165 = ssub.s32 %s13, 1
        // Predicated region
        $region33: #{tpu_custom_call.1} parent=31 // pred_check
          %p166 = pneg %p86
        $region34: #{tpu_custom_call.1} parent=31 // pred_check_branch
          %168 = sbr.rel (%p166) target = $region36
        $region35: #{tpu_custom_call.1} parent=31 // pred_region
          %170 = dma.done [#allocation3], 4096
        $region36: #{tpu_custom_call.1} parent=31 // pred_fallthru
          _
        %p171 = scmp.lt.s32.totalorder %s18, 1
        %s172 = scalar_select %p171, %s18, 1
        %s173 = smul.addr %s172, 8
        %s174 = scalar_lea.vmem %s0, %s173
        %p175 = pneg %p39
        %p176 = pneg %p36
        %p177 = scmp.lt.s32.totalorder %s18, 1
        %s178 = scalar_select %p177, %s18, 1
        %s179 = smul.addr %s178, 8
        %s180 = scalar_lea.vmem %s1, %s179
        %p181 = pneg %p65
        %p182 = pneg %p62
        %p183 = pneg %p86
        %p184 = pneg %p83
        %p185 = pneg %p112
        %p186 = pneg %p109
        %s187 = sand.u32 %s99, 1
        %s188 = scalar_lea.sflag [#allocation4], %s187
        %s189 = sand.u32 %s99, 1
        %s190 = smul.addr %s189, 8
        %s191 = scalar_lea.vmem [#allocation5], %s190
        %p192 = scmp.lt.s32.totalorder %s18, 1
        %s193 = scalar_select %p192, %s18, 1
        %s194 = smul.addr %s193, 8
        %s195 = scalar_lea.vmem %s0, %s194
        %p196 = scmp.lt.s32.totalorder %s18, 1
        %s197 = scalar_select %p196, %s18, 1
        %s198 = smul.addr %s197, 8
        %s199 = scalar_lea.vmem %s1, %s198
        %v200 = vlaneseq
        %v201 = vand.u32 %v200, 127
        %v202 = vadd.s32 %v201, 128
        %v203 = vld [vmem:[%s195] sm:$0xff]
        %204 = vset.pattern.permute.xlu0 0
        %205 = vperm.xlu0 %204, %v203
        %v206 = vpop.permute.xlu0 %205
        %vm207 = vcmp.eq.s32.totalorder %v201, %v206
        %vm208 = vcmp.eq.s32.totalorder %v202, %v206
        %v209 = vld [vmem:[%s199] sm:$0xff]
        %210 = vset.pattern.permute.xlu0 0
        %211 = vperm.xlu0 %210, %v209
        %v212 = vpop.permute.xlu0 %211
        %vm213 = vcmp.eq.s32.totalorder %v201, %v212
        %vm214 = vcmp.eq.s32.totalorder %v202, %v212
        %vm215 = vmor %vm207, %vm213
        %vm216 = vmor %vm208, %vm214
        %v217 = vsel %vm215, 1, 0
        %v218 = vsel %vm216, 1, 0
        %v219 = vcvt.s32.f32 %v217
        %v220 = vcvt.s32.f32 %v218
        %v221 = vld [vmem:[#allocation2] sm:$0xff]
        %v222 = vld [vmem:[#allocation2 + $0x8] sm:$0xff]
        %v223 = vld [vmem:[#allocation2 + $0x10] sm:$0xff]
        %v224 = vld [vmem:[#allocation2 + $0x18] sm:$0xff]
        %v225 = vld [vmem:[#allocation2 + $0x20] sm:$0xff]
        %v226 = vld [vmem:[#allocation2 + $0x28] sm:$0xff]
        %v227 = vld [vmem:[#allocation2 + $0x30] sm:$0xff]
        %v228 = vld [vmem:[#allocation2 + $0x38] sm:$0xff]
        %v229 = vld [vmem:[#allocation2 + $0x40] sm:$0xff]
        %v230 = vld [vmem:[#allocation2 + $0x48] sm:$0xff]
        %v231 = vld [vmem:[#allocation2 + $0x50] sm:$0xff]
        %v232 = vld [vmem:[#allocation2 + $0x58] sm:$0xff]
        %v233 = vld [vmem:[#allocation2 + $0x60] sm:$0xff]
        %v234 = vld [vmem:[#allocation2 + $0x68] sm:$0xff]
        %v235 = vld [vmem:[#allocation2 + $0x70] sm:$0xff]
        %v236 = vld [vmem:[#allocation2 + $0x78] sm:$0xff]
        %v237 = vld [vmem:[#allocation2 + $0x80] sm:$0xff]
        %v238 = vld [vmem:[#allocation2 + $0x88] sm:$0xff]
        %v239 = vld [vmem:[#allocation2 + $0x90] sm:$0xff]
        %v240 = vld [vmem:[#allocation2 + $0x98] sm:$0xff]
        %v241 = vld [vmem:[#allocation2 + $0xa0] sm:$0xff]
        %v242 = vld [vmem:[#allocation2 + $0xa8] sm:$0xff]
        %v243 = vld [vmem:[#allocation2 + $0xb0] sm:$0xff]
        %v244 = vld [vmem:[#allocation2 + $0xb8] sm:$0xff]
        %v245 = vld [vmem:[#allocation2 + $0xc0] sm:$0xff]
        %v246 = vld [vmem:[#allocation2 + $0xc8] sm:$0xff]
        %v247 = vld [vmem:[#allocation2 + $0xd0] sm:$0xff]
        %v248 = vld [vmem:[#allocation2 + $0xd8] sm:$0xff]
        %v249 = vld [vmem:[#allocation2 + $0xe0] sm:$0xff]
        %v250 = vld [vmem:[#allocation2 + $0xe8] sm:$0xff]
        %v251 = vld [vmem:[#allocation2 + $0xf0] sm:$0xff]
        %v252 = vld [vmem:[#allocation2 + $0xf8] sm:$0xff]
        %v253 = vand.u32 %v236, 4294901760
        %254 = vmatpush.msra.mxu0 %v253
        %v255 = vand.u32 %v235, 4294901760
        %256 = vmatpush.msra.mxu0 %v255
        %v257 = vand.u32 %v234, 4294901760
        %258 = vmatpush.msra.mxu0 %v257
        %v259 = vand.u32 %v233, 4294901760
        %260 = vmatpush.msra.mxu0 %v259
        %v261 = vand.u32 %v232, 4294901760
        %262 = vmatpush.msra.mxu0 %v261
        %v263 = vand.u32 %v231, 4294901760
        %264 = vmatpush.msra.mxu0 %v263
        %v265 = vand.u32 %v230, 4294901760
        %266 = vmatpush.msra.mxu0 %v265
        %v267 = vand.u32 %v229, 4294901760
        %268 = vmatpush.msra.mxu0 %v267
        %v269 = vand.u32 %v228, 4294901760
        %270 = vmatpush.msra.mxu0 %v269
        %v271 = vand.u32 %v227, 4294901760
        %272 = vmatpush.msra.mxu0 %v271
        %v273 = vand.u32 %v226, 4294901760
        %274 = vmatpush.msra.mxu0 %v273
        %v275 = vand.u32 %v225, 4294901760
        %276 = vmatpush.msra.mxu0 %v275
        %v277 = vand.u32 %v224, 4294901760
        %278 = vmatpush.msra.mxu0 %v277
        %v279 = vand.u32 %v223, 4294901760
        %280 = vmatpush.msra.mxu0 %v279
        %v281 = vand.u32 %v222, 4294901760
        %282 = vmatpush.msra.mxu0 %v281
        %v283 = vand.u32 %v221, 4294901760
        %284 = vmatpush.msra.mxu0 %v283
        %v285 = vand.u32 %v219, 4294901760
        %v286 = vsub.f32 %v219, %v285
        %v287 = vand.u32 %v286, 4294901760
        %v288 = vsub.f32 %v286, %v287
        %v289 = vand.u32 %v288, 4294901760
        %290 = vmatmul.f32.gmra.mxu0 %v289
        %v291 = vpop.f32.mrf.mxu0
        %v292 = vadd.f32 0.0, %v291
        %293 = vdwg.mxu0
        %v294 = vand.u32 %v236, 4294901760
        %v295 = vsub.f32 %v236, %v294
        %v296 = vand.u32 %v295, 4294901760
        %v297 = vsub.f32 %v295, %v296
        %v298 = vand.u32 %v297, 4294901760
        %299 = vmatpush.msra.mxu0 %v298
        %v300 = vand.u32 %v235, 4294901760
        %v301 = vsub.f32 %v235, %v300
        %v302 = vand.u32 %v301, 4294901760
        %v303 = vsub.f32 %v301, %v302
        %v304 = vand.u32 %v303, 4294901760
        %305 = vmatpush.msra.mxu0 %v304
        %v306 = vand.u32 %v234, 4294901760
        %v307 = vsub.f32 %v234, %v306
        %v308 = vand.u32 %v307, 4294901760
        %v309 = vsub.f32 %v307, %v308
        %v310 = vand.u32 %v309, 4294901760
        %311 = vmatpush.msra.mxu0 %v310
        %v312 = vand.u32 %v233, 4294901760
        %v313 = vsub.f32 %v233, %v312
        %v314 = vand.u32 %v313, 4294901760
        %v315 = vsub.f32 %v313, %v314
        %v316 = vand.u32 %v315, 4294901760
        %317 = vmatpush.msra.mxu0 %v316
        %v318 = vand.u32 %v232, 4294901760
        %v319 = vsub.f32 %v232, %v318
        %v320 = vand.u32 %v319, 4294901760
        %v321 = vsub.f32 %v319, %v320
        %v322 = vand.u32 %v321, 4294901760
        %323 = vmatpush.msra.mxu0 %v322
        %v324 = vand.u32 %v231, 4294901760
        %v325 = vsub.f32 %v231, %v324
        %v326 = vand.u32 %v325, 4294901760
        %v327 = vsub.f32 %v325, %v326
        %v328 = vand.u32 %v327, 4294901760
        %329 = vmatpush.msra.mxu0 %v328
        %v330 = vand.u32 %v230, 4294901760
        %v331 = vsub.f32 %v230, %v330
        %v332 = vand.u32 %v331, 4294901760
        %v333 = vsub.f32 %v331, %v332
        %v334 = vand.u32 %v333, 4294901760
        %335 = vmatpush.msra.mxu0 %v334
        %v336 = vand.u32 %v229, 4294901760
        %v337 = vsub.f32 %v229, %v336
        %v338 = vand.u32 %v337, 4294901760
        %v339 = vsub.f32 %v337, %v338
        %v340 = vand.u32 %v339, 4294901760
        %341 = vmatpush.msra.mxu0 %v340
        %v342 = vand.u32 %v228, 4294901760
        %v343 = vsub.f32 %v228, %v342
        %v344 = vand.u32 %v343, 4294901760
        %v345 = vsub.f32 %v343, %v344
        %v346 = vand.u32 %v345, 4294901760
        %347 = vmatpush.msra.mxu0 %v346
        %v348 = vand.u32 %v227, 4294901760
        %v349 = vsub.f32 %v227, %v348
        %v350 = vand.u32 %v349, 4294901760
        %v351 = vsub.f32 %v349, %v350
        %v352 = vand.u32 %v351, 4294901760
        %353 = vmatpush.msra.mxu0 %v352
        %v354 = vand.u32 %v226, 4294901760
        %v355 = vsub.f32 %v226, %v354
        %v356 = vand.u32 %v355, 4294901760
        %v357 = vsub.f32 %v355, %v356
        %v358 = vand.u32 %v357, 4294901760
        %359 = vmatpush.msra.mxu0 %v358
        %v360 = vand.u32 %v225, 4294901760
        %v361 = vsub.f32 %v225, %v360
        %v362 = vand.u32 %v361, 4294901760
        %v363 = vsub.f32 %v361, %v362
        %v364 = vand.u32 %v363, 4294901760
        %365 = vmatpush.msra.mxu0 %v364
        %v366 = vand.u32 %v224, 4294901760
        %v367 = vsub.f32 %v224, %v366
        %v368 = vand.u32 %v367, 4294901760
        %v369 = vsub.f32 %v367, %v368
        %v370 = vand.u32 %v369, 4294901760
        %371 = vmatpush.msra.mxu0 %v370
        %v372 = vand.u32 %v223, 4294901760
        %v373 = vsub.f32 %v223, %v372
        %v374 = vand.u32 %v373, 4294901760
        %v375 = vsub.f32 %v373, %v374
        %v376 = vand.u32 %v375, 4294901760
        %377 = vmatpush.msra.mxu0 %v376
        %v378 = vand.u32 %v222, 4294901760
        %v379 = vsub.f32 %v222, %v378
        %v380 = vand.u32 %v379, 4294901760
        %v381 = vsub.f32 %v379, %v380
        %v382 = vand.u32 %v381, 4294901760
        %383 = vmatpush.msra.mxu0 %v382
        %v384 = vand.u32 %v221, 4294901760
        %v385 = vsub.f32 %v221, %v384
        %v386 = vand.u32 %v385, 4294901760
        %v387 = vsub.f32 %v385, %v386
        %v388 = vand.u32 %v387, 4294901760
        %389 = vmatpush.msra.mxu0 %v388
        %v390 = vand.u32 %v219, 4294901760
        %391 = vmatmul.f32.gmra.mxu0 %v390
        %v392 = vpop.f32.mrf.mxu0
        %v393 = vadd.f32 %v292, %v392
        %394 = vdwg.mxu0
        %v395 = vand.u32 %v236, 4294901760
        %v396 = vsub.f32 %v236, %v395
        %397 = vmatpush.msra.mxu0 %v396
        %v398 = vand.u32 %v235, 4294901760
        %v399 = vsub.f32 %v235, %v398
        %400 = vmatpush.msra.mxu0 %v399
        %v401 = vand.u32 %v234, 4294901760
        %v402 = vsub.f32 %v234, %v401
        %403 = vmatpush.msra.mxu0 %v402
        %v404 = vand.u32 %v233, 4294901760
        %v405 = vsub.f32 %v233, %v404
        %406 = vmatpush.msra.mxu0 %v405
        %v407 = vand.u32 %v232, 4294901760
        %v408 = vsub.f32 %v232, %v407
        %409 = vmatpush.msra.mxu0 %v408
        %v410 = vand.u32 %v231, 4294901760
        %v411 = vsub.f32 %v231, %v410
        %412 = vmatpush.msra.mxu0 %v411
        %v413 = vand.u32 %v230, 4294901760
        %v414 = vsub.f32 %v230, %v413
        %415 = vmatpush.msra.mxu0 %v414
        %v416 = vand.u32 %v229, 4294901760
        %v417 = vsub.f32 %v229, %v416
        %418 = vmatpush.msra.mxu0 %v417
        %v419 = vand.u32 %v228, 4294901760
        %v420 = vsub.f32 %v228, %v419
        %421 = vmatpush.msra.mxu0 %v420
        %v422 = vand.u32 %v227, 4294901760
        %v423 = vsub.f32 %v227, %v422
        %424 = vmatpush.msra.mxu0 %v423
        %v425 = vand.u32 %v226, 4294901760
        %v426 = vsub.f32 %v226, %v425
        %427 = vmatpush.msra.mxu0 %v426
        %v428 = vand.u32 %v225, 4294901760
        %v429 = vsub.f32 %v225, %v428
        %430 = vmatpush.msra.mxu0 %v429
        %v431 = vand.u32 %v224, 4294901760
        %v432 = vsub.f32 %v224, %v431
        %433 = vmatpush.msra.mxu0 %v432
        %v434 = vand.u32 %v223, 4294901760
        %v435 = vsub.f32 %v223, %v434
        %436 = vmatpush.msra.mxu0 %v435
        %v437 = vand.u32 %v222, 4294901760
        %v438 = vsub.f32 %v222, %v437
        %439 = vmatpush.msra.mxu0 %v438
        %v440 = vand.u32 %v221, 4294901760
        %v441 = vsub.f32 %v221, %v440
        %442 = vmatpush.msra.mxu0 %v441
        %v443 = vand.u32 %v219, 4294901760
        %v444 = vsub.f32 %v219, %v443
        %445 = vmatmul.f32.gmra.mxu0 %v444
        %v446 = vpop.f32.mrf.mxu0
        %v447 = vadd.f32 %v393, %v446
        %448 = vdwg.mxu0
        %v449 = vand.u32 %v236, 4294901760
        %450 = vmatpush.msra.mxu0 %v449
        %v451 = vand.u32 %v235, 4294901760
        %452 = vmatpush.msra.mxu0 %v451
        %v453 = vand.u32 %v234, 4294901760
        %454 = vmatpush.msra.mxu0 %v453
        %v455 = vand.u32 %v233, 4294901760
        %456 = vmatpush.msra.mxu0 %v455
        %v457 = vand.u32 %v232, 4294901760
        %458 = vmatpush.msra.mxu0 %v457
        %v459 = vand.u32 %v231, 4294901760
        %460 = vmatpush.msra.mxu0 %v459
        %v461 = vand.u32 %v230, 4294901760
        %462 = vmatpush.msra.mxu0 %v461
        %v463 = vand.u32 %v229, 4294901760
        %464 = vmatpush.msra.mxu0 %v463
        %v465 = vand.u32 %v228, 4294901760
        %466 = vmatpush.msra.mxu0 %v465
        %v467 = vand.u32 %v227, 4294901760
        %468 = vmatpush.msra.mxu0 %v467
        %v469 = vand.u32 %v226, 4294901760
        %470 = vmatpush.msra.mxu0 %v469
        %v471 = vand.u32 %v225, 4294901760
        %472 = vmatpush.msra.mxu0 %v471
        %v473 = vand.u32 %v224, 4294901760
        %474 = vmatpush.msra.mxu0 %v473
        %v475 = vand.u32 %v223, 4294901760
        %476 = vmatpush.msra.mxu0 %v475
        %v477 = vand.u32 %v222, 4294901760
        %478 = vmatpush.msra.mxu0 %v477
        %v479 = vand.u32 %v221, 4294901760
        %480 = vmatpush.msra.mxu0 %v479
        %v481 = vand.u32 %v219, 4294901760
        %v482 = vsub.f32 %v219, %v481
        %v483 = vand.u32 %v482, 4294901760
        %484 = vmatmul.f32.gmra.mxu0 %v483
        %v485 = vpop.f32.mrf.mxu0
        %v486 = vadd.f32 %v447, %v485
        %487 = vdwg.mxu0
        %v488 = vand.u32 %v236, 4294901760
        %v489 = vsub.f32 %v236, %v488
        %v490 = vand.u32 %v489, 4294901760
        %491 = vmatpush.msra.mxu0 %v490
        %v492 = vand.u32 %v235, 4294901760
        %v493 = vsub.f32 %v235, %v492
        %v494 = vand.u32 %v493, 4294901760
        %495 = vmatpush.msra.mxu0 %v494
        %v496 = vand.u32 %v234, 4294901760
        %v497 = vsub.f32 %v234, %v496
        %v498 = vand.u32 %v497, 4294901760
        %499 = vmatpush.msra.mxu0 %v498
        %v500 = vand.u32 %v233, 4294901760
        %v501 = vsub.f32 %v233, %v500
        %v502 = vand.u32 %v501, 4294901760
        %503 = vmatpush.msra.mxu0 %v502
        %v504 = vand.u32 %v232, 4294901760
        %v505 = vsub.f32 %v232, %v504
        %v506 = vand.u32 %v505, 4294901760
        %507 = vmatpush.msra.mxu0 %v506
        %v508 = vand.u32 %v231, 4294901760
        %v509 = vsub.f32 %v231, %v508
        %v510 = vand.u32 %v509, 4294901760
        %511 = vmatpush.msra.mxu0 %v510
        %v512 = vand.u32 %v230, 4294901760
        %v513 = vsub.f32 %v230, %v512
        %v514 = vand.u32 %v513, 4294901760
        %515 = vmatpush.msra.mxu0 %v514
        %v516 = vand.u32 %v229, 4294901760
        %v517 = vsub.f32 %v229, %v516
        %v518 = vand.u32 %v517, 4294901760
        %519 = vmatpush.msra.mxu0 %v518
        %v520 = vand.u32 %v228, 4294901760
        %v521 = vsub.f32 %v228, %v520
        %v522 = vand.u32 %v521, 4294901760
        %523 = vmatpush.msra.mxu0 %v522
        %v524 = vand.u32 %v227, 4294901760
        %v525 = vsub.f32 %v227, %v524
        %v526 = vand.u32 %v525, 4294901760
        %527 = vmatpush.msra.mxu0 %v526
        %v528 = vand.u32 %v226, 4294901760
        %v529 = vsub.f32 %v226, %v528
        %v530 = vand.u32 %v529, 4294901760
        %531 = vmatpush.msra.mxu0 %v530
        %v532 = vand.u32 %v225, 4294901760
        %v533 = vsub.f32 %v225, %v532
        %v534 = vand.u32 %v533, 4294901760
        %535 = vmatpush.msra.mxu0 %v534
        %v536 = vand.u32 %v224, 4294901760
        %v537 = vsub.f32 %v224, %v536
        %v538 = vand.u32 %v537, 4294901760
        %539 = vmatpush.msra.mxu0 %v538
        %v540 = vand.u32 %v223, 4294901760
        %v541 = vsub.f32 %v223, %v540
        %v542 = vand.u32 %v541, 4294901760
        %543 = vmatpush.msra.mxu0 %v542
        %v544 = vand.u32 %v222, 4294901760
        %v545 = vsub.f32 %v222, %v544
        %v546 = vand.u32 %v545, 4294901760
        %547 = vmatpush.msra.mxu0 %v546
        %v548 = vand.u32 %v221, 4294901760
        %v549 = vsub.f32 %v221, %v548
        %v550 = vand.u32 %v549, 4294901760
        %551 = vmatpush.msra.mxu0 %v550
        %v552 = vand.u32 %v219, 4294901760
        %553 = vmatmul.f32.gmra.mxu0 %v552
        %v554 = vpop.f32.mrf.mxu0
        %v555 = vadd.f32 %v486, %v554
        %556 = vdwg.mxu0
        %v557 = vand.u32 %v236, 4294901760
        %558 = vmatpush.msra.mxu0 %v557
        %v559 = vand.u32 %v235, 4294901760
        %560 = vmatpush.msra.mxu0 %v559
        %v561 = vand.u32 %v234, 4294901760
        %562 = vmatpush.msra.mxu0 %v561
        %v563 = vand.u32 %v233, 4294901760
        %564 = vmatpush.msra.mxu0 %v563
        %v565 = vand.u32 %v232, 4294901760
        %566 = vmatpush.msra.mxu0 %v565
        %v567 = vand.u32 %v231, 4294901760
        %568 = vmatpush.msra.mxu0 %v567
        %v569 = vand.u32 %v230, 4294901760
        %570 = vmatpush.msra.mxu0 %v569
        %v571 = vand.u32 %v229, 4294901760
        %572 = vmatpush.msra.mxu0 %v571
        %v573 = vand.u32 %v228, 4294901760
        %574 = vmatpush.msra.mxu0 %v573
        %v575 = vand.u32 %v227, 4294901760
        %576 = vmatpush.msra.mxu0 %v575
        %v577 = vand.u32 %v226, 4294901760
        %578 = vmatpush.msra.mxu0 %v577
        %v579 = vand.u32 %v225, 4294901760
        %580 = vmatpush.msra.mxu0 %v579
        %v581 = vand.u32 %v224, 4294901760
        %582 = vmatpush.msra.mxu0 %v581
        %v583 = vand.u32 %v223, 4294901760
        %584 = vmatpush.msra.mxu0 %v583
        %v585 = vand.u32 %v222, 4294901760
        %586 = vmatpush.msra.mxu0 %v585
        %v587 = vand.u32 %v221, 4294901760
        %588 = vmatpush.msra.mxu0 %v587
        %v589 = vand.u32 %v219, 4294901760
        %590 = vmatmul.f32.gmra.mxu0 %v589
        %v591 = vpop.f32.mrf.mxu0
        %v592 = vadd.f32 %v555, %v591
        %593 = vdwg.mxu0
        %v594 = vand.u32 %v252, 4294901760
        %595 = vmatpush.msra.mxu0 %v594
        %v596 = vand.u32 %v251, 4294901760
        %597 = vmatpush.msra.mxu0 %v596
        %v598 = vand.u32 %v250, 4294901760
        %599 = vmatpush.msra.mxu0 %v598
        %v600 = vand.u32 %v249, 4294901760
        %601 = vmatpush.msra.mxu0 %v600
        %v602 = vand.u32 %v248, 4294901760
        %603 = vmatpush.msra.mxu0 %v602
        %v604 = vand.u32 %v247, 4294901760
        %605 = vmatpush.msra.mxu0 %v604
        %v606 = vand.u32 %v246, 4294901760
        %607 = vmatpush.msra.mxu0 %v606
        %v608 = vand.u32 %v245, 4294901760
        %609 = vmatpush.msra.mxu0 %v608
        %v610 = vand.u32 %v244, 4294901760
        %611 = vmatpush.msra.mxu0 %v610
        %v612 = vand.u32 %v243, 4294901760
        %613 = vmatpush.msra.mxu0 %v612
        %v614 = vand.u32 %v242, 4294901760
        %615 = vmatpush.msra.mxu0 %v614
        %v616 = vand.u32 %v241, 4294901760
        %617 = vmatpush.msra.mxu0 %v616
        %v618 = vand.u32 %v240, 4294901760
        %619 = vmatpush.msra.mxu0 %v618
        %v620 = vand.u32 %v239, 4294901760
        %621 = vmatpush.msra.mxu0 %v620
        %v622 = vand.u32 %v238, 4294901760
        %623 = vmatpush.msra.mxu0 %v622
        %v624 = vand.u32 %v237, 4294901760
        %625 = vmatpush.msra.mxu0 %v624
        %v626 = vand.u32 %v220, 4294901760
        %v627 = vsub.f32 %v220, %v626
        %v628 = vand.u32 %v627, 4294901760
        %v629 = vsub.f32 %v627, %v628
        %v630 = vand.u32 %v629, 4294901760
        %631 = vmatmul.f32.gmra.mxu0 %v630
        %v632 = vpop.f32.mrf.mxu0
        %v633 = vadd.f32 %v592, %v632
        %634 = vdwg.mxu0
        %v635 = vand.u32 %v252, 4294901760
        %v636 = vsub.f32 %v252, %v635
        %v637 = vand.u32 %v636, 4294901760
        %v638 = vsub.f32 %v636, %v637
        %v639 = vand.u32 %v638, 4294901760
        %640 = vmatpush.msra.mxu0 %v639
        %v641 = vand.u32 %v251, 4294901760
        %v642 = vsub.f32 %v251, %v641
        %v643 = vand.u32 %v642, 4294901760
        %v644 = vsub.f32 %v642, %v643
        %v645 = vand.u32 %v644, 4294901760
        %646 = vmatpush.msra.mxu0 %v645
        %v647 = vand.u32 %v250, 4294901760
        %v648 = vsub.f32 %v250, %v647
        %v649 = vand.u32 %v648, 4294901760
        %v650 = vsub.f32 %v648, %v649
        %v651 = vand.u32 %v650, 4294901760
        %652 = vmatpush.msra.mxu0 %v651
        %v653 = vand.u32 %v249, 4294901760
        %v654 = vsub.f32 %v249, %v653
        %v655 = vand.u32 %v654, 4294901760
        %v656 = vsub.f32 %v654, %v655
        %v657 = vand.u32 %v656, 4294901760
        %658 = vmatpush.msra.mxu0 %v657
        %v659 = vand.u32 %v248, 4294901760
        %v660 = vsub.f32 %v248, %v659
        %v661 = vand.u32 %v660, 4294901760
        %v662 = vsub.f32 %v660, %v661
        %v663 = vand.u32 %v662, 4294901760
        %664 = vmatpush.msra.mxu0 %v663
        %v665 = vand.u32 %v247, 4294901760
        %v666 = vsub.f32 %v247, %v665
        %v667 = vand.u32 %v666, 4294901760
        %v668 = vsub.f32 %v666, %v667
        %v669 = vand.u32 %v668, 4294901760
        %670 = vmatpush.msra.mxu0 %v669
        %v671 = vand.u32 %v246, 4294901760
        %v672 = vsub.f32 %v246, %v671
        %v673 = vand.u32 %v672, 4294901760
        %v674 = vsub.f32 %v672, %v673
        %v675 = vand.u32 %v674, 4294901760
        %676 = vmatpush.msra.mxu0 %v675
        %v677 = vand.u32 %v245, 4294901760
        %v678 = vsub.f32 %v245, %v677
        %v679 = vand.u32 %v678, 4294901760
        %v680 = vsub.f32 %v678, %v679
        %v681 = vand.u32 %v680, 4294901760
        %682 = vmatpush.msra.mxu0 %v681
        %v683 = vand.u32 %v244, 4294901760
        %v684 = vsub.f32 %v244, %v683
        %v685 = vand.u32 %v684, 4294901760
        %v686 = vsub.f32 %v684, %v685
        %v687 = vand.u32 %v686, 4294901760
        %688 = vmatpush.msra.mxu0 %v687
        %v689 = vand.u32 %v243, 4294901760
        %v690 = vsub.f32 %v243, %v689
        %v691 = vand.u32 %v690, 4294901760
        %v692 = vsub.f32 %v690, %v691
        %v693 = vand.u32 %v692, 4294901760
        %694 = vmatpush.msra.mxu0 %v693
        %v695 = vand.u32 %v242, 4294901760
        %v696 = vsub.f32 %v242, %v695
        %v697 = vand.u32 %v696, 4294901760
        %v698 = vsub.f32 %v696, %v697
        %v699 = vand.u32 %v698, 4294901760
        %700 = vmatpush.msra.mxu0 %v699
        %v701 = vand.u32 %v241, 4294901760
        %v702 = vsub.f32 %v241, %v701
        %v703 = vand.u32 %v702, 4294901760
        %v704 = vsub.f32 %v702, %v703
        %v705 = vand.u32 %v704, 4294901760
        %706 = vmatpush.msra.mxu0 %v705
        %v707 = vand.u32 %v240, 4294901760
        %v708 = vsub.f32 %v240, %v707
        %v709 = vand.u32 %v708, 4294901760
        %v710 = vsub.f32 %v708, %v709
        %v711 = vand.u32 %v710, 4294901760
        %712 = vmatpush.msra.mxu0 %v711
        %v713 = vand.u32 %v239, 4294901760
        %v714 = vsub.f32 %v239, %v713
        %v715 = vand.u32 %v714, 4294901760
        %v716 = vsub.f32 %v714, %v715
        %v717 = vand.u32 %v716, 4294901760
        %718 = vmatpush.msra.mxu0 %v717
        %v719 = vand.u32 %v238, 4294901760
        %v720 = vsub.f32 %v238, %v719
        %v721 = vand.u32 %v720, 4294901760
        %v722 = vsub.f32 %v720, %v721
        %v723 = vand.u32 %v722, 4294901760
        %724 = vmatpush.msra.mxu0 %v723
        %v725 = vand.u32 %v237, 4294901760
        %v726 = vsub.f32 %v237, %v725
        %v727 = vand.u32 %v726, 4294901760
        %v728 = vsub.f32 %v726, %v727
        %v729 = vand.u32 %v728, 4294901760
        %730 = vmatpush.msra.mxu0 %v729
        %v731 = vand.u32 %v220, 4294901760
        %732 = vmatmul.f32.gmra.mxu0 %v731
        %v733 = vpop.f32.mrf.mxu0
        %v734 = vadd.f32 %v633, %v733
        %735 = vdwg.mxu0
        %v736 = vand.u32 %v252, 4294901760
        %v737 = vsub.f32 %v252, %v736
        %738 = vmatpush.msra.mxu0 %v737
        %v739 = vand.u32 %v251, 4294901760
        %v740 = vsub.f32 %v251, %v739
        %741 = vmatpush.msra.mxu0 %v740
        %v742 = vand.u32 %v250, 4294901760
        %v743 = vsub.f32 %v250, %v742
        %744 = vmatpush.msra.mxu0 %v743
        %v745 = vand.u32 %v249, 4294901760
        %v746 = vsub.f32 %v249, %v745
        %747 = vmatpush.msra.mxu0 %v746
        %v748 = vand.u32 %v248, 4294901760
        %v749 = vsub.f32 %v248, %v748
        %750 = vmatpush.msra.mxu0 %v749
        %v751 = vand.u32 %v247, 4294901760
        %v752 = vsub.f32 %v247, %v751
        %753 = vmatpush.msra.mxu0 %v752
        %v754 = vand.u32 %v246, 4294901760
        %v755 = vsub.f32 %v246, %v754
        %756 = vmatpush.msra.mxu0 %v755
        %v757 = vand.u32 %v245, 4294901760
        %v758 = vsub.f32 %v245, %v757
        %759 = vmatpush.msra.mxu0 %v758
        %v760 = vand.u32 %v244, 4294901760
        %v761 = vsub.f32 %v244, %v760
        %762 = vmatpush.msra.mxu0 %v761
        %v763 = vand.u32 %v243, 4294901760
        %v764 = vsub.f32 %v243, %v763
        %765 = vmatpush.msra.mxu0 %v764
        %v766 = vand.u32 %v242, 4294901760
        %v767 = vsub.f32 %v242, %v766
        %768 = vmatpush.msra.mxu0 %v767
        %v769 = vand.u32 %v241, 4294901760
        %v770 = vsub.f32 %v241, %v769
        %771 = vmatpush.msra.mxu0 %v770
        %v772 = vand.u32 %v240, 4294901760
        %v773 = vsub.f32 %v240, %v772
        %774 = vmatpush.msra.mxu0 %v773
        %v775 = vand.u32 %v239, 4294901760
        %v776 = vsub.f32 %v239, %v775
        %777 = vmatpush.msra.mxu0 %v776
        %v778 = vand.u32 %v238, 4294901760
        %v779 = vsub.f32 %v238, %v778
        %780 = vmatpush.msra.mxu0 %v779
        %v781 = vand.u32 %v237, 4294901760
        %v782 = vsub.f32 %v237, %v781
        %783 = vmatpush.msra.mxu0 %v782
        %v784 = vand.u32 %v220, 4294901760
        %v785 = vsub.f32 %v220, %v784
        %786 = vmatmul.f32.gmra.mxu0 %v785
        %v787 = vpop.f32.mrf.mxu0
        %v788 = vadd.f32 %v734, %v787
        %789 = vdwg.mxu0
        %v790 = vand.u32 %v252, 4294901760
        %791 = vmatpush.msra.mxu0 %v790
        %v792 = vand.u32 %v251, 4294901760
        %793 = vmatpush.msra.mxu0 %v792
        %v794 = vand.u32 %v250, 4294901760
        %795 = vmatpush.msra.mxu0 %v794
        %v796 = vand.u32 %v249, 4294901760
        %797 = vmatpush.msra.mxu0 %v796
        %v798 = vand.u32 %v248, 4294901760
        %799 = vmatpush.msra.mxu0 %v798
        %v800 = vand.u32 %v247, 4294901760
        %801 = vmatpush.msra.mxu0 %v800
        %v802 = vand.u32 %v246, 4294901760
        %803 = vmatpush.msra.mxu0 %v802
        %v804 = vand.u32 %v245, 4294901760
        %805 = vmatpush.msra.mxu0 %v804
        %v806 = vand.u32 %v244, 4294901760
        %807 = vmatpush.msra.mxu0 %v806
        %v808 = vand.u32 %v243, 4294901760
        %809 = vmatpush.msra.mxu0 %v808
        %v810 = vand.u32 %v242, 4294901760
        %811 = vmatpush.msra.mxu0 %v810
        %v812 = vand.u32 %v241, 4294901760
        %813 = vmatpush.msra.mxu0 %v812
        %v814 = vand.u32 %v240, 4294901760
        %815 = vmatpush.msra.mxu0 %v814
        %v816 = vand.u32 %v239, 4294901760
        %817 = vmatpush.msra.mxu0 %v816
        %v818 = vand.u32 %v238, 4294901760
        %819 = vmatpush.msra.mxu0 %v818
        %v820 = vand.u32 %v237, 4294901760
        %821 = vmatpush.msra.mxu0 %v820
        %v822 = vand.u32 %v220, 4294901760
        %v823 = vsub.f32 %v220, %v822
        %v824 = vand.u32 %v823, 4294901760
        %825 = vmatmul.f32.gmra.mxu0 %v824
        %v826 = vpop.f32.mrf.mxu0
        %v827 = vadd.f32 %v788, %v826
        %828 = vdwg.mxu0
        %v829 = vand.u32 %v252, 4294901760
        %v830 = vsub.f32 %v252, %v829
        %v831 = vand.u32 %v830, 4294901760
        %832 = vmatpush.msra.mxu0 %v831
        %v833 = vand.u32 %v251, 4294901760
        %v834 = vsub.f32 %v251, %v833
        %v835 = vand.u32 %v834, 4294901760
        %836 = vmatpush.msra.mxu0 %v835
        %v837 = vand.u32 %v250, 4294901760
        %v838 = vsub.f32 %v250, %v837
        %v839 = vand.u32 %v838, 4294901760
        %840 = vmatpush.msra.mxu0 %v839
        %v841 = vand.u32 %v249, 4294901760
        %v842 = vsub.f32 %v249, %v841
        %v843 = vand.u32 %v842, 4294901760
        %844 = vmatpush.msra.mxu0 %v843
        %v845 = vand.u32 %v248, 4294901760
        %v846 = vsub.f32 %v248, %v845
        %v847 = vand.u32 %v846, 4294901760
        %848 = vmatpush.msra.mxu0 %v847
        %v849 = vand.u32 %v247, 4294901760
        %v850 = vsub.f32 %v247, %v849
        %v851 = vand.u32 %v850, 4294901760
        %852 = vmatpush.msra.mxu0 %v851
        %v853 = vand.u32 %v246, 4294901760
        %v854 = vsub.f32 %v246, %v853
        %v855 = vand.u32 %v854, 4294901760
        %856 = vmatpush.msra.mxu0 %v855
        %v857 = vand.u32 %v245, 4294901760
        %v858 = vsub.f32 %v245, %v857
        %v859 = vand.u32 %v858, 4294901760
        %860 = vmatpush.msra.mxu0 %v859
        %v861 = vand.u32 %v244, 4294901760
        %v862 = vsub.f32 %v244, %v861
        %v863 = vand.u32 %v862, 4294901760
        %864 = vmatpush.msra.mxu0 %v863
        %v865 = vand.u32 %v243, 4294901760
        %v866 = vsub.f32 %v243, %v865
        %v867 = vand.u32 %v866, 4294901760
        %868 = vmatpush.msra.mxu0 %v867
        %v869 = vand.u32 %v242, 4294901760
        %v870 = vsub.f32 %v242, %v869
        %v871 = vand.u32 %v870, 4294901760
        %872 = vmatpush.msra.mxu0 %v871
        %v873 = vand.u32 %v241, 4294901760
        %v874 = vsub.f32 %v241, %v873
        %v875 = vand.u32 %v874, 4294901760
        %876 = vmatpush.msra.mxu0 %v875
        %v877 = vand.u32 %v240, 4294901760
        %v878 = vsub.f32 %v240, %v877
        %v879 = vand.u32 %v878, 4294901760
        %880 = vmatpush.msra.mxu0 %v879
        %v881 = vand.u32 %v239, 4294901760
        %v882 = vsub.f32 %v239, %v881
        %v883 = vand.u32 %v882, 4294901760
        %884 = vmatpush.msra.mxu0 %v883
        %v885 = vand.u32 %v238, 4294901760
        %v886 = vsub.f32 %v238, %v885
        %v887 = vand.u32 %v886, 4294901760
        %888 = vmatpush.msra.mxu0 %v887
        %v889 = vand.u32 %v237, 4294901760
        %v890 = vsub.f32 %v237, %v889
        %v891 = vand.u32 %v890, 4294901760
        %892 = vmatpush.msra.mxu0 %v891
        %v893 = vand.u32 %v220, 4294901760
        %894 = vmatmul.f32.gmra.mxu0 %v893
        %v895 = vpop.f32.mrf.mxu0
        %v896 = vadd.f32 %v827, %v895
        %897 = vdwg.mxu0
        %v898 = vand.u32 %v252, 4294901760
        %899 = vmatpush.msra.mxu0 %v898
        %v900 = vand.u32 %v251, 4294901760
        %901 = vmatpush.msra.mxu0 %v900
        %v902 = vand.u32 %v250, 4294901760
        %903 = vmatpush.msra.mxu0 %v902
        %v904 = vand.u32 %v249, 4294901760
        %905 = vmatpush.msra.mxu0 %v904
        %v906 = vand.u32 %v248, 4294901760
        %907 = vmatpush.msra.mxu0 %v906
        %v908 = vand.u32 %v247, 4294901760
        %909 = vmatpush.msra.mxu0 %v908
        %v910 = vand.u32 %v246, 4294901760
        %911 = vmatpush.msra.mxu0 %v910
        %v912 = vand.u32 %v245, 4294901760
        %913 = vmatpush.msra.mxu0 %v912
        %v914 = vand.u32 %v244, 4294901760
        %915 = vmatpush.msra.mxu0 %v914
        %v916 = vand.u32 %v243, 4294901760
        %917 = vmatpush.msra.mxu0 %v916
        %v918 = vand.u32 %v242, 4294901760
        %919 = vmatpush.msra.mxu0 %v918
        %v920 = vand.u32 %v241, 4294901760
        %921 = vmatpush.msra.mxu0 %v920
        %v922 = vand.u32 %v240, 4294901760
        %923 = vmatpush.msra.mxu0 %v922
        %v924 = vand.u32 %v239, 4294901760
        %925 = vmatpush.msra.mxu0 %v924
        %v926 = vand.u32 %v238, 4294901760
        %927 = vmatpush.msra.mxu0 %v926
        %v928 = vand.u32 %v237, 4294901760
        %929 = vmatpush.msra.mxu0 %v928
        %v930 = vand.u32 %v220, 4294901760
        %931 = vmatmul.f32.gmra.mxu0 %v930
        %v932 = vpop.f32.mrf.mxu0
        %v933 = vadd.f32 %v896, %v932
        %934 = vdwg.mxu0
        %935 = vst [vmem:[%s191] sm:$0xff] %v933
        %s936 = sand.u32 %s99, 1
        %s937 = scalar_lea.sflag [#allocation4], %s936
        %s938 = sand.u32 %s99, 1
        %s939 = smul.addr %s938, 8
        %s940 = scalar_lea.vmem [#allocation5], %s939
        // Predicated region
        $region37: #{tpu_custom_call.1} parent=31 // pred_check
          %p941 = pneg %p109
        $region38: #{tpu_custom_call.1} parent=31 // pred_check_branch
          %943 = sbr.rel (%p941) target = $region40
        $region39: #{tpu_custom_call.1} parent=31 // pred_region
          %945 = vsyncadd %s937, 0
          %s946 = smul.addr %s18, 8
          %s947 = scalar_lea.hbm %s3, %s946
          %s949 = sshll.u32 %s940, 4
          %s950 = int_to_ptr.vmem [resolvable:$true] %s949
          %s951 = sshll.u32 %s947, 4
          %s952 = int_to_ptr.hbm [resolvable:$true] %s951
          %954 = dma.vmem_to_hbm [thread:$0]  %s950, 128, %s952, %s937
        $region40: #{tpu_custom_call.1} parent=31 // pred_fallthru
          _
      $region32: #{tpu_custom_call.1} parent=5 // pred_fallthru
        _
      %p955 = scmp.le.s32.totalorder 2, %s13
      // Predicated region
      $region41: #{tpu_custom_call.1} parent=5 // pred_check
        %p956 = pneg %p955
      $region42: #{tpu_custom_call.1} parent=5 // pred_check_branch
        %958 = sbr.rel (%p956) target = $region44
      $region43: #{tpu_custom_call.1} parent=5 // pred_region
        %s959 = ssub.s32 %s13, 2
        // Predicated region
        $region45: #{tpu_custom_call.1} parent=43 // pred_check
          %p960 = pneg %p115
        $region46: #{tpu_custom_call.1} parent=43 // pred_check_branch
          %962 = sbr.rel (%p960) target = $region48
        $region47: #{tpu_custom_call.1} parent=43 // pred_region
          %s963 = sand.u32 %s100, 1
          %s964 = scalar_lea.sflag [#allocation4], %s963
          %s965 = sand.u32 %s100, 1
          %s966 = smul.addr %s965, 8
          %s967 = scalar_lea.vmem [#allocation5], %s966
          %969 = dma.done %s964, 128
        $region48: #{tpu_custom_call.1} parent=43 // pred_fallthru
          _
      $region44: #{tpu_custom_call.1} parent=5 // pred_fallthru
        _
    $region6: #{tpu_custom_call.1} parent=1 // loop_footer
      %s17 = sadd.s32 1, %s13
    $region7: #{tpu_custom_call.1} parent=1 // loop_footer_branch
      %12 = sbr.rel target = $region3
    $region8: #{tpu_custom_call.1} parent=1 // loop_exit
      _
    %970 = vsyncpa [#allocation3], 1
    %s971 = scalar_lea.sflag [#allocation3], 1
    %972 = vsyncpa %s971, 1
    %973 = vsyncpa [#allocation4], 1
    %s974 = scalar_lea.sflag [#allocation4], 1
    %975 = vsyncpa %s974, 1

</llo_original>
